<compile_context>
chip_gen: v7x
topology: tpu7x:2x2x1
jax: 0.10.0
libtpu: 0.0.40
codegen_flags: <defaults>
</compile_context>

<pallas_src>
import jax
import jax.numpy as jnp
from jax.experimental import pallas as pl
from jax.experimental.pallas import tpu as pltpu

EPS = 1e-6

# VMEM budgeting: 3 streamed (row_tile, H) arrays (x, sublayer(x), out), each
# double-buffered by the BlockSpec pipeline, plus the in-kernel f32 working set.
_VMEM_LIMIT_BYTES = 40 * 1024 * 1024   # scoped VMEM limit (safe on v7x's 64 MiB)
_TILE_VMEM_BUDGET = 28 * 1024 * 1024   # budget for streams + f32 intermediates
_MAX_ROW_TILE = 256                    # ~2-4 MiB input blocks: amortizes the
                                       # ~0.35us/step overhead, low VMEM pressure


def _choose_row_tile(n_rows: int, hidden: int, in_dtypes, out_dtype) -> int:
    """Row tile sized against the VMEM budget, multiple of the sublane pack."""
    itemsizes = [jnp.dtype(dt).itemsize for dt in (*in_dtypes, out_dtype)]
    sublane = 16 if min(itemsizes) == 2 else 8     # bf16 packs 16 rows / vreg
    # Double-buffered streams + (non-pipelined) f32 intermediates per row.
    stream_bytes = sum(2 * hidden * s for s in itemsizes)
    work_bytes = 2 * hidden * 4                    # f32 y / diff tiles
    per_row = stream_bytes + work_bytes
    tile = max(sublane, min(_MAX_ROW_TILE, _TILE_VMEM_BUDGET // per_row))
    tile = max(sublane, (tile // sublane) * sublane)
    # No point tiling larger than the (sublane-rounded) row count.
    rows_ceil = pl.cdiv(n_rows, sublane) * sublane
    tile = min(tile, rows_ceil)
    # Prefer >= 2 grid steps so v7x's two TensorCores both get work.
    if tile >= n_rows and n_rows > 2 * sublane:
        tile = max(sublane, pl.cdiv(pl.cdiv(n_rows, 2), sublane) * sublane)
    return tile


def _make_sublayer_kernel(hidden: int, eps: float):
    """Returns the kernel body with static feature size / eps closed over."""
    inv_h = 1.0 / hidden
    inv_hm1 = 1.0 / (hidden - 1)

    def kernel(x_ref, sub_ref, a_ref, b_ref, o_ref):
        # Residual add (dropout == identity in eval mode); accumulate in f32.
        y = x_ref[...].astype(jnp.float32) + sub_ref[...].astype(jnp.float32)

        # Two-pass moments on the VMEM-resident tile (no cancellation risk).
        mean = jnp.sum(y, axis=-1, keepdims=True) * inv_h          # (TR, 1)
        diff = y - mean
        # torch .std() uses the unbiased estimator (divide by H-1).
        var = jnp.sum(diff * diff, axis=-1, keepdims=True) * inv_hm1
        std = jnp.sqrt(var)

        # Exact per-row reciprocal: one divide per row, negligible cost, and
        # avoids the ~1e-4 relative error of the approx EUP path.
        inv = 1.0 / (std + eps)                                     # (TR, 1)

        # Scale/shift in the output dtype (bf16 tail when I/O is bf16; for f32
        # this is identical to doing it in f32).
        t = (diff * inv).astype(o_ref.dtype)
        o_ref[...] = a_ref[...] * t + b_ref[...]

    return kernel


def sublayer_connection(x, sub_out, a_2, b_2, *, eps=EPS, row_tile=None):
    """x, sub_out: (B, S, H); a_2, b_2: (H,).  Returns (B, S, H) in x.dtype."""
    B, S, H = x.shape
    R = B * S
    out_dtype = x.dtype

    x2 = x.reshape(R, H)
    s2 = sub_out.reshape(R, H)          # native dtype; the kernel upcasts to f32

    if row_tile is None:
        row_tile = _choose_row_tile(R, H, (x2.dtype, s2.dtype), out_dtype)

    # Params staged in the output dtype (exact for the default ones/zeros).
    a2 = a_2.reshape(1, H).astype(out_dtype)
    b2 = b_2.reshape(1, H).astype(out_dtype)

    grid = (pl.cdiv(R, row_tile),)      # ragged last block handled by masking

    itemsz = lambda dt: jnp.dtype(dt).itemsize
    cost = pl.CostEstimate(
        flops=10 * R * H,
        transcendentals=2 * R,
        bytes_accessed=R * H * (itemsz(x2.dtype) + itemsz(s2.dtype)
                                + itemsz(out_dtype)),
    )

    kernel = _make_sublayer_kernel(H, eps)

    out = pl.pallas_call(
        kernel,
        out_shape=jax.ShapeDtypeStruct((R, H), out_dtype),
        grid_spec=pltpu.PrefetchScalarGridSpec(
            num_scalar_prefetch=0,
            grid=grid,
            in_specs=[
                pl.BlockSpec((row_tile, H), lambda i: (i, 0)),  # x rows
                pl.BlockSpec((row_tile, H), lambda i: (i, 0)),  # sublayer(x) rows
                pl.BlockSpec((1, H), lambda i: (0, 0)),         # a_2 (broadcast)
                pl.BlockSpec((1, H), lambda i: (0, 0)),         # b_2 (broadcast)
            ],
            out_specs=pl.BlockSpec((row_tile, H), lambda i: (i, 0)),
        ),
        compiler_params=pltpu.CompilerParams(
            dimension_semantics=("parallel",),     # row grid sharded across TCs
            vmem_limit_bytes=_VMEM_LIMIT_BYTES,
        ),
        cost_estimate=cost,
    )(x2, s2, a2, b2)

    return out.reshape(B, S, H)


if __name__ == "__main__":
    key = jax.random.PRNGKey(0)
    B, S, H = 2, 8, 32  # batch, seq, hidden (features = H)
    # NOTE: production transformer H (>=128, multiple of 128) keeps lanes dense;
    # the tiny demo H=32 only exercises correctness.

    kx, kw, kb = jax.random.split(key, 3)
    x = jax.random.normal(kx, (B, S, H), dtype=jnp.float32)

    # Deterministic parameters (as in LayerNorm.__init__: ones / zeros).
    a_2 = jnp.ones((H,), dtype=jnp.float32)
    b_2 = jnp.zeros((H,), dtype=jnp.float32)

    # A simple deterministic sublayer (plain-JAX glue): a linear projection.
    w = jax.random.normal(kw, (H, H), dtype=jnp.float32) * 0.1
    bias = jax.random.normal(kb, (H,), dtype=jnp.float32) * 0.1
    sub_out = x @ w + bias  # sublayer(x)

    out = sublayer_connection(x, sub_out, a_2, b_2)
    out = jax.block_until_ready(out)

    # Reference check in plain JAX (torch-equivalent semantics).
    y = x + sub_out
    mean = jnp.mean(y, axis=-1, keepdims=True)
    std = jnp.sqrt(jnp.sum((y - mean) ** 2, axis=-1, keepdims=True) / (H - 1))
    ref = a_2 * ((y - mean) / (std + EPS)) + b_2
    assert jnp.allclose(out, ref, atol=1e-5, rtol=1e-5), "mismatch vs reference"

    print("KERNEL_OK")
</pallas_src>

<mosaic_0001>
module attributes {stable_mosaic.version = 11 : i64} {
  func.func @kernel(%arg0: i32, %arg1: memref<16x32xf32, #tpu.memory_space<vmem>>, %arg2: memref<16x32xf32, #tpu.memory_space<vmem>>, %arg3: memref<1x32xf32, #tpu.memory_space<vmem>>, %arg4: memref<1x32xf32, #tpu.memory_space<vmem>>, %arg5: memref<16x32xf32, #tpu.memory_space<vmem>>) attributes {dimension_semantics = [#tpu.dimension_semantics<parallel>], iteration_bounds = array<i64: 1>, scalar_prefetch = 0 : i64, scratch_operands = 0 : i64, tpu.core_type = #tpu.core_type<tc>, window_params = [{transform_indices = @transform_0, window_bounds = array<i64: 16, 32>}, {transform_indices = @transform_1, window_bounds = array<i64: 16, 32>}, {pipeline_mode = #tpu.pipeline_mode<synchronous>, transform_indices = @transform_2, window_bounds = array<i64: 1, 32>}, {pipeline_mode = #tpu.pipeline_mode<synchronous>, transform_indices = @transform_3, window_bounds = array<i64: 1, 32>}, {transform_indices = @transform_4, window_bounds = array<i64: 16, 32>}]} {
    %c0 = arith.constant 0 : index
    %c0_0 = arith.constant 0 : index
    %0 = vector.load %arg1[%c0, %c0_0] : memref<16x32xf32, #tpu.memory_space<vmem>>, vector<16x32xf32>
    %c0_1 = arith.constant 0 : index
    %c0_2 = arith.constant 0 : index
    %1 = vector.load %arg2[%c0_1, %c0_2] : memref<16x32xf32, #tpu.memory_space<vmem>>, vector<16x32xf32>
    %2 = arith.addf %0, %1 : vector<16x32xf32>
    %cst = arith.constant dense<0.000000e+00> : vector<16xf32>
    %3 = vector.multi_reduction <add>, %2, %cst [1] : vector<16x32xf32> to vector<16xf32>
    %4 = vector.shape_cast %3 : vector<16xf32> to vector<16x1xf32>
    %cst_3 = arith.constant 3.125000e-02 : f32
    %5 = vector.broadcast %cst_3 : f32 to vector<16x1xf32>
    %6 = arith.mulf %4, %5 : vector<16x1xf32>
    %7 = vector.broadcast %6 : vector<16x1xf32> to vector<16x32xf32>
    %8 = arith.subf %2, %7 : vector<16x32xf32>
    %9 = arith.mulf %8, %8 : vector<16x32xf32>
    %cst_4 = arith.constant dense<0.000000e+00> : vector<16xf32>
    %10 = vector.multi_reduction <add>, %9, %cst_4 [1] : vector<16x32xf32> to vector<16xf32>
    %11 = vector.shape_cast %10 : vector<16xf32> to vector<16x1xf32>
    %cst_5 = arith.constant 0.0322580636 : f32
    %12 = vector.broadcast %cst_5 : f32 to vector<16x1xf32>
    %13 = arith.mulf %11, %12 : vector<16x1xf32>
    %14 = math.sqrt %13 : vector<16x1xf32>
    %cst_6 = arith.constant 9.99999997E-7 : f32
    %15 = vector.broadcast %cst_6 : f32 to vector<16x1xf32>
    %16 = arith.addf %14, %15 : vector<16x1xf32>
    %cst_7 = arith.constant 1.000000e+00 : f32
    %17 = vector.broadcast %cst_7 : f32 to vector<16x1xf32>
    %18 = arith.divf %17, %16 : vector<16x1xf32>
    %19 = vector.broadcast %18 : vector<16x1xf32> to vector<16x32xf32>
    %20 = arith.mulf %8, %19 : vector<16x32xf32>
    %c0_8 = arith.constant 0 : index
    %c0_9 = arith.constant 0 : index
    %21 = vector.load %arg3[%c0_8, %c0_9] : memref<1x32xf32, #tpu.memory_space<vmem>>, vector<1x32xf32>
    %22 = vector.broadcast %21 : vector<1x32xf32> to vector<16x32xf32>
    %23 = arith.mulf %22, %20 : vector<16x32xf32>
    %c0_10 = arith.constant 0 : index
    %c0_11 = arith.constant 0 : index
    %24 = vector.load %arg4[%c0_10, %c0_11] : memref<1x32xf32, #tpu.memory_space<vmem>>, vector<1x32xf32>
    %25 = vector.broadcast %24 : vector<1x32xf32> to vector<16x32xf32>
    %26 = arith.addf %23, %25 : vector<16x32xf32>
    %c0_12 = arith.constant 0 : index
    %c0_13 = arith.constant 0 : index
    %27 = vector.load %arg5[%c0_12, %c0_13] : memref<16x32xf32, #tpu.memory_space<vmem>>, vector<16x32xf32>
    tpu.vector_store %arg5[%c0_12, %c0_13], %26 {strides = array<i32>} : memref<16x32xf32, #tpu.memory_space<vmem>>, vector<16x32xf32>,
    return
  }
  func.func @transform_0(%arg0: i32) -> (i32, i32) {
    %c0_i32 = arith.constant 0 : i32
    %c0_i32_0 = arith.constant 0 : i32
    return %arg0, %c0_i32 : i32, i32
  }
  func.func @transform_1(%arg0: i32) -> (i32, i32) {
    %c0_i32 = arith.constant 0 : i32
    %c0_i32_0 = arith.constant 0 : i32
    return %arg0, %c0_i32 : i32, i32
  }
  func.func @transform_2(%arg0: i32) -> (i32, i32) {
    %c0_i32 = arith.constant 0 : i32
    %c0_i32_0 = arith.constant 0 : i32
    %c0_i32_1 = arith.constant 0 : i32
    return %c0_i32, %c0_i32_0 : i32, i32
  }
  func.func @transform_3(%arg0: i32) -> (i32, i32) {
    %c0_i32 = arith.constant 0 : i32
    %c0_i32_0 = arith.constant 0 : i32
    %c0_i32_1 = arith.constant 0 : i32
    return %c0_i32, %c0_i32_0 : i32, i32
  }
  func.func @transform_4(%arg0: i32) -> (i32, i32) {
    %c0_i32 = arith.constant 0 : i32
    %c0_i32_0 = arith.constant 0 : i32
    return %arg0, %c0_i32 : i32, i32
  }
}

</mosaic_0001>

<llo_original>
// kernel: tpu_custom_call.1
$region0: #{tpu_custom_call.1}
  #allocation0 [shape = 'u32[]', space=smem, size = 0x4, offset = 0x4, fixed_abs, tag = 'smem constant byte address 0x4 - core index']
  #allocation1 [shape = 'u32[144,128]{1,0:T(1,128)}', space=vmem, size = 0x12000, scoped, tag = 'internal scratch']
  %s0 = inlined_call_operand.hbm [shape: f32[16,32], index: 0, kind: input, shape index: {}]
  %s1 = inlined_call_operand.hbm [shape: f32[16,32], index: 1, kind: input, shape index: {}]
  %s2 = inlined_call_operand.vmem [shape: f32[1,32], index: 2, kind: input, shape index: {}]
  %s3 = inlined_call_operand.vmem [shape: f32[1,32], index: 3, kind: input, shape index: {}]
  %s4 = inlined_call_operand.hbm [shape: f32[16,32], index: 4, kind: output, shape index: {}]
  %s5 = sld [smem:[#allocation0]]
  $region34: #{tpu_custom_call.1} parent=0
    _
  %s7 = ssub.s32 1, %s5
  %s8 = scalar_select 0, %s7, %s5
  $region1: #{tpu_custom_call.1} parent=0
    #allocation2 [shape = 'u8[8192]{0}', space=vmem, size = 0x2000, scoped, tag = 'input window, operand 0, single buffered']
    #allocation3 [shape = 's32[1]{0}', space=sflag, size = 0x4, scoped, tag = 'scoped memory for tpu_custom_call.1']
    #allocation4 [shape = 's32[1]{0}', space=sflag, size = 0x4, scoped, tag = 'scoped memory for tpu_custom_call.1']
    #allocation5 [shape = 'u8[8192]{0}', space=vmem, size = 0x2000, scoped, tag = 'input window, operand 1, single buffered']
    #allocation6 [shape = 's32[1]{0}', space=sflag, size = 0x4, scoped, tag = 'scoped memory for tpu_custom_call.1']
    #allocation7 [shape = 'u8[8192]{0}', space=vmem, size = 0x2000, scoped, tag = 'output window, operand 0, single buffered']
    %9 = vsyncpa [#allocation3], 0
    %10 = vsyncpa [#allocation6], 0
    %11 = vsyncpa [#allocation4], 0
    // Predicated region
    $region2: #{tpu_custom_call.1} parent=1 // pred_check
      _
    $region3: #{tpu_custom_call.1} parent=1 // pred_check_branch
      %13 = sbr.rel (0) target = $region5
    $region4: #{tpu_custom_call.1} parent=1 // pred_region
      %s15 = ssub.s32 256, 256
      %16 = vsyncadd [#allocation3], %s15
      %s17 = sshll.u32 [#allocation2], 4
      %s18 = int_to_ptr.vmem [resolvable:$true] %s17
      %23 = dma.hbm_to_vmem [thread:$0]  %s0, 256, %s18, [#allocation3], 128, 128, 8
    $region5: #{tpu_custom_call.1} parent=1 // pred_fallthru
      _
    // Predicated region
    $region6: #{tpu_custom_call.1} parent=1 // pred_check
      _
    $region7: #{tpu_custom_call.1} parent=1 // pred_check_branch
      %25 = sbr.rel (0) target = $region9
    $region8: #{tpu_custom_call.1} parent=1 // pred_region
      %s27 = ssub.s32 256, 256
      %28 = vsyncadd [#allocation6], %s27
      %s29 = sshll.u32 [#allocation5], 4
      %s30 = int_to_ptr.vmem [resolvable:$true] %s29
      %35 = dma.hbm_to_vmem [thread:$0]  %s1, 256, %s30, [#allocation6], 128, 128, 8
    $region9: #{tpu_custom_call.1} parent=1 // pred_fallthru
      _
    // Predicated region
    $region10: #{tpu_custom_call.1} parent=1 // pred_check
      _
    $region11: #{tpu_custom_call.1} parent=1 // pred_check_branch
      %37 = sbr.rel (0) target = $region13
    $region12: #{tpu_custom_call.1} parent=1 // pred_region
      _
    $region13: #{tpu_custom_call.1} parent=1 // pred_fallthru
      _
    // Predicated region
    $region14: #{tpu_custom_call.1} parent=1 // pred_check
      _
    $region15: #{tpu_custom_call.1} parent=1 // pred_check_branch
      %39 = sbr.rel (0) target = $region17
    $region16: #{tpu_custom_call.1} parent=1 // pred_region
      _
    $region17: #{tpu_custom_call.1} parent=1 // pred_fallthru
      _
    // Predicated region
    $region18: #{tpu_custom_call.1} parent=1 // pred_check
      _
    $region19: #{tpu_custom_call.1} parent=1 // pred_check_branch
      %41 = sbr.rel (0) target = $region21
    $region20: #{tpu_custom_call.1} parent=1 // pred_region
      %42 = dma.done [#allocation3], 256
    $region21: #{tpu_custom_call.1} parent=1 // pred_fallthru
      _
    // Predicated region
    $region22: #{tpu_custom_call.1} parent=1 // pred_check
      _
    $region23: #{tpu_custom_call.1} parent=1 // pred_check_branch
      %44 = sbr.rel (0) target = $region25
    $region24: #{tpu_custom_call.1} parent=1 // pred_region
      %45 = dma.done [#allocation6], 256
    $region25: #{tpu_custom_call.1} parent=1 // pred_fallthru
      _
    %v46 = vld [vmem:[#allocation2] sm:$0xff]
    %v47 = vld [vmem:[#allocation2 + $0x8] sm:$0xff]
    %v48 = vld [vmem:[#allocation5] sm:$0xff]
    %v49 = vld [vmem:[#allocation5 + $0x8] sm:$0xff]
    %v50 = vadd.f32 %v46, %v48
    %v51 = vadd.f32 %v47, %v49
    %vm52 = vcmask 261120
    %v53 = vsel %vm52, %v50, 0.0
    %54 = vadd.xlane.f32.xlu0 %v53
    %v55 = vpop.xlane.xlu0 %54
    %v56 = vsel %vm52, %v51, 0.0
    %57 = vadd.xlane.f32.xlu0 %v56
    %v58 = vpop.xlane.xlu0 %57
    %v59 = vmul.f32 %v55, 0.03125
    %v60 = vmul.f32 %v58, 0.03125
    %v61 = vsub.f32 %v50, %v59
    %v62 = vsub.f32 %v51, %v60
    %v63 = vmul.f32 %v61, %v61
    %v64 = vmul.f32 %v62, %v62
    %v65 = vsel %vm52, %v63, 0.0
    %66 = vadd.xlane.f32.xlu0 %v65
    %v67 = vpop.xlane.xlu0 %66
    %v68 = vsel %vm52, %v64, 0.0
    %69 = vadd.xlane.f32.xlu0 %v68
    %v70 = vpop.xlane.xlu0 %69
    %v71 = vmul.f32 %v67, 0.032258064
    %v72 = vmul.f32 %v70, 0.032258064
    %v73 = vrsqrt.pop %v71
    %v74 = vmul.f32 %v71, %v73
    %vm75 = vcmp.eq.f32.partialorder %v71, inf
    %v76 = vsel %vm75, %v71, %v74
    %vm77 = vcmp.eq.f32.partialorder %v71, 0.0
    %v78 = vand.u32 %v71, 2147483648
    %v79 = vsel %vm77, %v78, %v76
    %v80 = vrsqrt.pop %v72
    %v81 = vmul.f32 %v72, %v80
    %vm82 = vcmp.eq.f32.partialorder %v72, inf
    %v83 = vsel %vm82, %v72, %v81
    %vm84 = vcmp.eq.f32.partialorder %v72, 0.0
    %v85 = vand.u32 %v72, 2147483648
    %v86 = vsel %vm84, %v85, %v83
    %v87 = vadd.f32 %v79, 1e-06
    %v88 = vadd.f32 %v86, 1e-06
    %v89 = vrcp.pop %v87
    %v90 = vmul.f32 1.0, %v89
    %v91 = vrcp.pop %v88
    %v92 = vmul.f32 1.0, %v91
    %v93 = vmul.f32 %v61, %v90
    %v94 = vmul.f32 %v62, %v92
    %v95 = vld [vmem:[%s2] sm:$0x1]
    %v97 = vlaneseq
    %v98 = vshrl.u32 %v97, 7
    %v99 = vsub.s32 0, %v98
    %v100 = vrot.slane %v95, %v99
    %v102 = vmul.f32 %v100, %v93
    %v103 = vmul.f32 %v100, %v94
    %v104 = vld [vmem:[%s3] sm:$0x1]
    %v106 = vlaneseq
    %v107 = vshrl.u32 %v106, 7
    %v108 = vsub.s32 0, %v107
    %v109 = vrot.slane %v104, %v108
    %v111 = vadd.f32 %v102, %v109
    %v112 = vadd.f32 %v103, %v109
    %113 = vst.msk [vmem:[#allocation7] sm:$0xff] %vm52, %v111
    %114 = vst.msk [vmem:[#allocation7 + $0x8] sm:$0xff] %vm52, %v112
    // Predicated region
    $region26: #{tpu_custom_call.1} parent=1 // pred_check
      _
    $region27: #{tpu_custom_call.1} parent=1 // pred_check_branch
      %116 = sbr.rel (0) target = $region29
    $region28: #{tpu_custom_call.1} parent=1 // pred_region
      %s118 = ssub.s32 256, 256
      %119 = vsyncadd [#allocation4], %s118
      %s120 = sshll.u32 [#allocation7], 4
      %s121 = int_to_ptr.vmem [resolvable:$true] %s120
      %126 = dma.vmem_to_hbm [thread:$0]  %s121, 256, %s4, [#allocation4], 128, 128, 8
    $region29: #{tpu_custom_call.1} parent=1 // pred_fallthru
      _
    // Predicated region
    $region30: #{tpu_custom_call.1} parent=1 // pred_check
      _
    $region31: #{tpu_custom_call.1} parent=1 // pred_check_branch
      %128 = sbr.rel (0) target = $region33
    $region32: #{tpu_custom_call.1} parent=1 // pred_region
      %129 = dma.done [#allocation4], 256
    $region33: #{tpu_custom_call.1} parent=1 // pred_fallthru
      _
    %130 = vsyncpa [#allocation3], 1
    %131 = vsyncpa [#allocation6], 1
    %132 = vsyncpa [#allocation4], 1

</llo_original>
